<compile_context>
chip_gen: v6e
topology: v6e:2x2x1
jax: 0.10.0
libtpu: 0.0.40
codegen_flags: <defaults>
</compile_context>

<pallas_src>
import functools

import jax
import jax.numpy as jnp
from jax import lax
from jax.experimental import pallas as pl
from jax.experimental.pallas import tpu as pltpu

_LANES = 128
_SUBLANES = 8


def _competition_kernel(h_ref, w3_ref, b_ref, o_ref, *, n_tokens, tile):
    """One token tile of the mechanism-competition forward.

    h_ref  : (ns, T, d_mech)   VMEM, input dtype (bf16 or f32)
    w3_ref : (ns, d_mech, ns)  VMEM, block-diagonal per-mechanism weights
    b_ref  : (1, ns)           VMEM, biases
    o_ref  : (ns, T)           VMEM, softmax-over-mechanisms scores
    """
    ns = h_ref.shape[0]
    t = h_ref.shape[1]

    # Per-mechanism Linear(d_mech, 1) on the MXU.  w3[s, :, s'] = w_c[s, :] for
    # s' == s and 0 otherwise, so accumulating the per-mechanism matmuls gives
    #   acc[t, s] = <h[s, t, :], w_c[s, :]>
    # directly -- no per-column selection, no lane reduce on the XLU.
    # ns is tiny & static; consuming h one mechanism at a time keeps the live
    # temporaries at (T, d) / (T, ns), never (ns, T, d).
    acc = jnp.zeros((t, ns), jnp.float32)
    for s in range(ns):
        acc = acc + jnp.dot(h_ref[s], w3_ref[s],
                            preferred_element_type=jnp.float32)
    acc = acc + b_ref[...].astype(jnp.float32)             # (1, ns) broadcast

    # Small relayout (T, ns) -> (ns, T): ~T*ns/1024 vregs through the XLU, so
    # exp / softmax reductions and the output store all run lane-dense.
    logits = jnp.transpose(acc)                            # (ns, T) f32

    # Ragged tail (static check): the last grid step may read past n_tokens.
    # Garbage only lives in its own token columns (the contraction is over the
    # never-padded d axis); force those logits finite so the discarded tail of
    # the masked output store stays NaN/Inf free.
    if n_tokens % tile != 0:
        col = lax.broadcasted_iota(jnp.int32, logits.shape, dimension=1)
        valid = n_tokens - pl.program_id(0) * tile
        logits = jnp.where(col < valid, logits, 0.0)

    # Numerically stable softmax across mechanisms (dim 0), exact divide.
    m = jnp.max(logits, axis=0, keepdims=True)
    e = jnp.exp(logits - m)
    denom = jnp.sum(e, axis=0, keepdims=True)
    o_ref[...] = (e / denom).astype(o_ref.dtype)


def _vmem_budget_bytes():
    """Usable per-step VMEM budget: ~96 MiB on v5e/v6e, ~48 MiB on v7x."""
    try:
        capacity = pltpu.get_tpu_info().vmem_capacity_bytes
    except Exception:  # non-TPU backend / interpret mode: assume v7x-sized VMEM
        capacity = 64 * 1024 * 1024
    return max(32 * 1024 * 1024, int(0.75 * capacity))


def _step_vmem_bytes(tile, ns, d_mech, itemsize, n_buffers):
    """VMEM for one pipelined grid step, including in-kernel temporaries."""
    d_lanes = pl.cdiv(d_mech, _LANES) * _LANES             # lane padding of h
    ns_sub = pl.cdiv(ns, _SUBLANES) * _SUBLANES            # sublane padding of out
    h_block = ns * tile * d_lanes * itemsize               # per pipeline buffer
    out_block = ns_sub * tile * itemsize
    temps = (tile * _LANES * 4                             # (T, ns) f32 acc (lane padded)
             + tile * d_lanes * itemsize                   # one (T, d) mechanism operand
             + 4 * ns_sub * tile * 4)                      # (ns, T) f32 softmax temporaries
    return n_buffers * h_block + 2 * out_block + temps


def _choose_token_tile(n_tokens, ns, d_mech, itemsize, requested, budget):
    """Largest lane-dense token tile that fits the VMEM budget, preferring
    >= 2 (and even) grid steps so both v7x TensorCores get balanced work."""
    if n_tokens < 2 * _LANES:
        # Too small to split into two lane-dense tiles: a single (possibly
        # sub-128) step is unavoidable; the problem is microscopic here anyway.
        return n_tokens
    tile = max(_LANES, (min(requested, n_tokens) // _LANES) * _LANES)
    while tile > _LANES and _step_vmem_bytes(tile, ns, d_mech, itemsize, 2) > budget:
        tile = max(_LANES, ((tile // 2) // _LANES) * _LANES)
    # Keep at least two grid steps (v7x has two TensorCores).
    while tile > _LANES and pl.cdiv(n_tokens, tile) < 2:
        tile = max(_LANES, ((tile // 2) // _LANES) * _LANES)
    # Prefer an even step count for balanced megacore sharding.
    steps = pl.cdiv(n_tokens, tile)
    if steps > 1 and steps % 2 == 1:
        tile = max(_LANES, pl.cdiv(pl.cdiv(n_tokens, steps + 1), _LANES) * _LANES)
    return tile


@functools.partial(jax.jit, static_argnames=("token_tile", "out_dtype"))
def mechanism_competition(h, w_c, b_c, *, token_tile=16384, out_dtype=None):
    """
    h   : (ns, batch, seq, d_mech)  float32 or bfloat16 (bf16 recommended: it
          halves the dominant HBM read; accumulation is f32 either way)
    w_c : (ns, d_mech)  stacked nn.Linear(d_mech, 1) weights
    b_c : (ns,)         stacked biases
    out_dtype : output dtype (defaults to h.dtype; pass jnp.float32 to keep
          full-precision probabilities for bf16 inputs).
    returns (ns, batch, seq, 1) softmax-over-mechanisms competition scores.
    """
    ns, batch, seq, d_mech = h.shape
    n_tokens = batch * seq
    itemsize = jnp.dtype(h.dtype).itemsize
    out_dtype = h.dtype if out_dtype is None else out_dtype

    budget = _vmem_budget_bytes()
    tile = _choose_token_tile(n_tokens, ns, d_mech, itemsize, token_tile, budget)
    n_steps = pl.cdiv(n_tokens, tile)

    # Free reshape; no HBM-side padding pass over h -- the ragged last tile is
    # masked inside the kernel instead.
    h_flat = h.reshape(ns, n_tokens, d_mech)

    # Embed each mechanism's weight vector into its own output column of a
    # tiny block-diagonal (ns, d_mech, ns) tensor so the in-kernel contraction
    # is a plain MXU matmul.  Cast to h's dtype so bf16 h feeds the MXU
    # directly (no whole-tile f32 upcast in VMEM).
    w3 = (w_c[:, :, None] * jnp.eye(ns, dtype=w_c.dtype)[:, None, :]).astype(h.dtype)
    b_row = b_c.reshape(1, ns).astype(jnp.float32)

    # Triple-buffer h only when tiles are small and the grid is long enough
    # for the extra buffer to help hide the DMA ramp.
    n_buffers = 3 if (tile <= 1024 and n_steps >= 4 and
                      _step_vmem_bytes(tile, ns, d_mech, itemsize, 3) <= budget) else 2
    h_spec_kwargs = {"pipeline_mode": pl.Buffered(3)} if n_buffers == 3 else {}
    h_spec = pl.BlockSpec((ns, tile, d_mech), lambda i: (0, i, 0), **h_spec_kwargs)

    vmem_limit = int(min(budget,
                         max(32 * 1024 * 1024,
                             2 * _step_vmem_bytes(tile, ns, d_mech, itemsize,
                                                  n_buffers))))

    out_itemsize = jnp.dtype(out_dtype).itemsize
    cost = pl.CostEstimate(
        flops=2 * ns * ns * n_tokens * d_mech,              # ns (T,d)@(d,ns) matmuls
        transcendentals=ns * n_tokens,                      # one exp per logit
        bytes_accessed=(ns * n_tokens * d_mech * itemsize   # read h (dominant)
                        + ns * d_mech * ns * itemsize + ns * 4
                        + ns * n_tokens * out_itemsize),    # write scores
    )

    kernel = functools.partial(_competition_kernel, n_tokens=n_tokens, tile=tile)
    out = pl.pallas_call(
        kernel,
        out_shape=jax.ShapeDtypeStruct((ns, n_tokens), out_dtype),
        grid_spec=pltpu.PrefetchScalarGridSpec(
            num_scalar_prefetch=0,
            grid=(n_steps,),
            in_specs=[
                h_spec,                                          # token tile of h
                pl.BlockSpec((ns, d_mech, ns), lambda i: (0, 0, 0)),  # w3 (tiny)
                pl.BlockSpec((1, ns), lambda i: (0, 0)),              # bias row
            ],
            out_specs=pl.BlockSpec((ns, tile), lambda i: (0, i)),     # lane-dense
        ),
        compiler_params=pltpu.CompilerParams(
            dimension_semantics=("parallel",),
            vmem_limit_bytes=vmem_limit,
        ),
        cost_estimate=cost,
    )(h_flat, w3, b_row)

    return out.reshape(ns, batch, seq, 1)


def _reference(h, w_c, b_c):
    """Pure-JAX reference of the PyTorch forward."""
    logits = jnp.einsum("sbtd,sd->sbt", h.astype(jnp.float32),
                        w_c.astype(jnp.float32)) \
        + b_c.astype(jnp.float32)[:, None, None]
    return jax.nn.softmax(logits, axis=0)[..., None]


def _run_case(key, ns, batch, seq, d_mech):
    k_h, k_w, k_b = jax.random.split(key, 3)
    h = jax.random.normal(k_h, (ns, batch, seq, d_mech), dtype=jnp.float32)
    bound = 1.0 / (d_mech ** 0.5)                 # nn.Linear(d_mech, 1) init range
    w_c = jax.random.uniform(k_w, (ns, d_mech), jnp.float32, -bound, bound)
    b_c = jax.random.uniform(k_b, (ns,), jnp.float32, -bound, bound)

    out = jax.block_until_ready(mechanism_competition(h, w_c, b_c))
    ref = _reference(h, w_c, b_c)

    assert out.shape == (ns, batch, seq, 1), out.shape
    # Tolerance covers the TPU default matmul precision (bf16-rounded products)
    # possibly differing between the in-kernel dot and the XLA reference einsum.
    err = float(jnp.max(jnp.abs(out.astype(jnp.float32) - ref)))
    assert jnp.allclose(out.astype(jnp.float32), ref, atol=5e-3, rtol=5e-3), \
        f"mismatch vs reference (max abs err {err:.2e})"
    # Competition weights must form a convex combination over mechanisms.
    assert jnp.allclose(jnp.sum(out.astype(jnp.float32), axis=0), 1.0, atol=1e-3)


if __name__ == "__main__":
    key = jax.random.PRNGKey(0)
    k1, k2 = jax.random.split(key)
    # Single lane-dense tile: batch*seq = 128 tokens.
    _run_case(k1, ns=4, batch=2, seq=64, d_mech=32)
    # Ragged tail: batch*seq = 300 tokens -> two 256-token steps, last one
    # masked in-kernel (no HBM-side padding pass over h).
    _run_case(k2, ns=4, batch=3, seq=100, d_mech=32)
    print("KERNEL_OK")
</pallas_src>

<mosaic_0001>
module attributes {stable_mosaic.version = 11 : i64} {
  func.func @_competition_kernel(%arg0: i32, %arg1: memref<4x128x32xf32, #tpu.memory_space<vmem>>, %arg2: memref<4x32x4xf32, #tpu.memory_space<vmem>>, %arg3: memref<1x4xf32, #tpu.memory_space<vmem>>, %arg4: memref<4x128xf32, #tpu.memory_space<vmem>>) attributes {dimension_semantics = [#tpu.dimension_semantics<parallel>], iteration_bounds = array<i64: 1>, scalar_prefetch = 0 : i64, scratch_operands = 0 : i64, tpu.core_type = #tpu.core_type<tc>, window_params = [{transform_indices = @transform_0, window_bounds = array<i64: 4, 128, 32>}, {pipeline_mode = #tpu.pipeline_mode<synchronous>, transform_indices = @transform_1, window_bounds = array<i64: 4, 32, 4>}, {pipeline_mode = #tpu.pipeline_mode<synchronous>, transform_indices = @transform_2, window_bounds = array<i64: 1, 4>}, {transform_indices = @transform_3, window_bounds = array<i64: 4, 128>}]} {
    %cst = arith.constant 0.000000e+00 : f32
    %0 = vector.broadcast %cst : f32 to vector<128x4xf32>
    %c0 = arith.constant 0 : index
    %c0_0 = arith.constant 0 : index
    %c0_1 = arith.constant 0 : index
    %1 = vector.load %arg1[%c0, %c0_0, %c0_1] : memref<4x128x32xf32, #tpu.memory_space<vmem>>, vector<1x128x32xf32>
    %2 = vector.shape_cast %1 : vector<1x128x32xf32> to vector<128x32xf32>
    %c0_2 = arith.constant 0 : index
    %c0_3 = arith.constant 0 : index
    %c0_4 = arith.constant 0 : index
    %3 = vector.load %arg2[%c0_2, %c0_3, %c0_4] : memref<4x32x4xf32, #tpu.memory_space<vmem>>, vector<1x32x4xf32>
    %4 = vector.shape_cast %3 : vector<1x32x4xf32> to vector<32x4xf32>
    %cst_5 = arith.constant dense<0.000000e+00> : vector<128x4xf32>
    %5 = tpu.matmul %2, %4, %cst_5 {dimension_numbers = #tpu.dot_dimension_numbers<[1], [0], [0], [1], [0, 0, 1, 1], [], []>} : vector<128x32xf32>, vector<32x4xf32>, vector<128x4xf32> -> vector<128x4xf32>
    %6 = arith.addf %0, %5 : vector<128x4xf32>
    %c1 = arith.constant 1 : index
    %c0_6 = arith.constant 0 : index
    %c0_7 = arith.constant 0 : index
    %7 = vector.load %arg1[%c1, %c0_6, %c0_7] : memref<4x128x32xf32, #tpu.memory_space<vmem>>, vector<1x128x32xf32>
    %8 = vector.shape_cast %7 : vector<1x128x32xf32> to vector<128x32xf32>
    %c1_8 = arith.constant 1 : index
    %c0_9 = arith.constant 0 : index
    %c0_10 = arith.constant 0 : index
    %9 = vector.load %arg2[%c1_8, %c0_9, %c0_10] : memref<4x32x4xf32, #tpu.memory_space<vmem>>, vector<1x32x4xf32>
    %10 = vector.shape_cast %9 : vector<1x32x4xf32> to vector<32x4xf32>
    %cst_11 = arith.constant dense<0.000000e+00> : vector<128x4xf32>
    %11 = tpu.matmul %8, %10, %cst_11 {dimension_numbers = #tpu.dot_dimension_numbers<[1], [0], [0], [1], [0, 0, 1, 1], [], []>} : vector<128x32xf32>, vector<32x4xf32>, vector<128x4xf32> -> vector<128x4xf32>
    %12 = arith.addf %6, %11 : vector<128x4xf32>
    %c2 = arith.constant 2 : index
    %c0_12 = arith.constant 0 : index
    %c0_13 = arith.constant 0 : index
    %13 = vector.load %arg1[%c2, %c0_12, %c0_13] : memref<4x128x32xf32, #tpu.memory_space<vmem>>, vector<1x128x32xf32>
    %14 = vector.shape_cast %13 : vector<1x128x32xf32> to vector<128x32xf32>
    %c2_14 = arith.constant 2 : index
    %c0_15 = arith.constant 0 : index
    %c0_16 = arith.constant 0 : index
    %15 = vector.load %arg2[%c2_14, %c0_15, %c0_16] : memref<4x32x4xf32, #tpu.memory_space<vmem>>, vector<1x32x4xf32>
    %16 = vector.shape_cast %15 : vector<1x32x4xf32> to vector<32x4xf32>
    %cst_17 = arith.constant dense<0.000000e+00> : vector<128x4xf32>
    %17 = tpu.matmul %14, %16, %cst_17 {dimension_numbers = #tpu.dot_dimension_numbers<[1], [0], [0], [1], [0, 0, 1, 1], [], []>} : vector<128x32xf32>, vector<32x4xf32>, vector<128x4xf32> -> vector<128x4xf32>
    %18 = arith.addf %12, %17 : vector<128x4xf32>
    %c3 = arith.constant 3 : index
    %c0_18 = arith.constant 0 : index
    %c0_19 = arith.constant 0 : index
    %19 = vector.load %arg1[%c3, %c0_18, %c0_19] : memref<4x128x32xf32, #tpu.memory_space<vmem>>, vector<1x128x32xf32>
    %20 = vector.shape_cast %19 : vector<1x128x32xf32> to vector<128x32xf32>
    %c3_20 = arith.constant 3 : index
    %c0_21 = arith.constant 0 : index
    %c0_22 = arith.constant 0 : index
    %21 = vector.load %arg2[%c3_20, %c0_21, %c0_22] : memref<4x32x4xf32, #tpu.memory_space<vmem>>, vector<1x32x4xf32>
    %22 = vector.shape_cast %21 : vector<1x32x4xf32> to vector<32x4xf32>
    %cst_23 = arith.constant dense<0.000000e+00> : vector<128x4xf32>
    %23 = tpu.matmul %20, %22, %cst_23 {dimension_numbers = #tpu.dot_dimension_numbers<[1], [0], [0], [1], [0, 0, 1, 1], [], []>} : vector<128x32xf32>, vector<32x4xf32>, vector<128x4xf32> -> vector<128x4xf32>
    %24 = arith.addf %18, %23 : vector<128x4xf32>
    %c0_24 = arith.constant 0 : index
    %c0_25 = arith.constant 0 : index
    %25 = vector.load %arg3[%c0_24, %c0_25] : memref<1x4xf32, #tpu.memory_space<vmem>>, vector<1x4xf32>
    %26 = vector.broadcast %25 : vector<1x4xf32> to vector<128x4xf32>
    %27 = arith.addf %24, %26 : vector<128x4xf32>
    %28 = tpu.transpose %27, [1, 0] : vector<128x4xf32> -> vector<4x128xf32>
    %cst_26 = arith.constant dense<0xFF800000> : vector<128xf32>
    %29 = vector.multi_reduction <maximumf>, %28, %cst_26 [0] : vector<4x128xf32> to vector<128xf32>
    %30 = vector.shape_cast %29 : vector<128xf32> to vector<1x128xf32>
    %31 = vector.broadcast %30 : vector<1x128xf32> to vector<4x128xf32>
    %32 = arith.subf %28, %31 : vector<4x128xf32>
    %33 = math.exp %32 : vector<4x128xf32>
    %cst_27 = arith.constant dense<0.000000e+00> : vector<128xf32>
    %34 = vector.multi_reduction <add>, %33, %cst_27 [0] : vector<4x128xf32> to vector<128xf32>
    %35 = vector.shape_cast %34 : vector<128xf32> to vector<1x128xf32>
    %36 = vector.broadcast %35 : vector<1x128xf32> to vector<4x128xf32>
    %37 = arith.divf %33, %36 : vector<4x128xf32>
    %c0_28 = arith.constant 0 : index
    %c0_29 = arith.constant 0 : index
    %38 = vector.load %arg4[%c0_28, %c0_29] : memref<4x128xf32, #tpu.memory_space<vmem>>, vector<4x128xf32>
    tpu.vector_store %arg4[%c0_28, %c0_29], %37 {strides = array<i32>} : memref<4x128xf32, #tpu.memory_space<vmem>>, vector<4x128xf32>,
    return
  }
  func.func @transform_0(%arg0: i32) -> (i32, i32, i32) {
    %c0_i32 = arith.constant 0 : i32
    %c0_i32_0 = arith.constant 0 : i32
    %c0_i32_1 = arith.constant 0 : i32
    return %c0_i32, %arg0, %c0_i32_0 : i32, i32, i32
  }
  func.func @transform_1(%arg0: i32) -> (i32, i32, i32) {
    %c0_i32 = arith.constant 0 : i32
    %c0_i32_0 = arith.constant 0 : i32
    %c0_i32_1 = arith.constant 0 : i32
    %c0_i32_2 = arith.constant 0 : i32
    return %c0_i32, %c0_i32_0, %c0_i32_1 : i32, i32, i32
  }
  func.func @transform_2(%arg0: i32) -> (i32, i32) {
    %c0_i32 = arith.constant 0 : i32
    %c0_i32_0 = arith.constant 0 : i32
    %c0_i32_1 = arith.constant 0 : i32
    return %c0_i32, %c0_i32_0 : i32, i32
  }
  func.func @transform_3(%arg0: i32) -> (i32, i32) {
    %c0_i32 = arith.constant 0 : i32
    %c0_i32_0 = arith.constant 0 : i32
    return %c0_i32, %arg0 : i32, i32
  }
}

</mosaic_0001>

<llo_original>
// kernel: mechanism_competition.1
$region0: #{mechanism_competition.1}
  #allocation0 [shape = 'u32[]', space=smem, size = 0x4, offset = 0x4, fixed_abs, tag = 'smem constant byte address 0x4 - core index']
  #allocation1 [shape = 'u32[144,128]{1,0:T(1,128)}', space=vmem, size = 0x12000, scoped, tag = 'internal scratch']
  %s0 = inlined_call_operand.vmem [shape: f32[4,128,32], index: 0, kind: input, shape index: {}]
  %s1 = inlined_call_operand.vmem [shape: f32[4,32,4], index: 1, kind: input, shape index: {}]
  %s2 = inlined_call_operand.vmem [shape: f32[1,4], index: 2, kind: input, shape index: {}]
  %s3 = inlined_call_operand.vmem [shape: f32[4,128], index: 3, kind: output, shape index: {}]
  %s4 = sld [smem:[#allocation0]]
  $region22: #{mechanism_competition.1} parent=0
    _
  %s6 = ssub.s32 1, %s4
  %s7 = scalar_select 0, %s6, %s4
  // Predicated region
  $region2: #{mechanism_competition.1} parent=0 // pred_check
    _
  $region3: #{mechanism_competition.1} parent=0 // pred_check_branch
    %9 = sbr.rel (0) target = $region5
  $region4: #{mechanism_competition.1} parent=0 // pred_region
    _
  $region5: #{mechanism_competition.1} parent=0 // pred_fallthru
    _
  // Predicated region
  $region6: #{mechanism_competition.1} parent=0 // pred_check
    _
  $region7: #{mechanism_competition.1} parent=0 // pred_check_branch
    %11 = sbr.rel (0) target = $region9
  $region8: #{mechanism_competition.1} parent=0 // pred_region
    _
  $region9: #{mechanism_competition.1} parent=0 // pred_fallthru
    _
  // Predicated region
  $region10: #{mechanism_competition.1} parent=0 // pred_check
    _
  $region11: #{mechanism_competition.1} parent=0 // pred_check_branch
    %13 = sbr.rel (0) target = $region13
  $region12: #{mechanism_competition.1} parent=0 // pred_region
    _
  $region13: #{mechanism_competition.1} parent=0 // pred_fallthru
    _
  %v14 = vld [vmem:[%s0] sm:$0xff]
  %v15 = vld [vmem:[%s0 + $0x8] sm:$0xff]
  %v16 = vld [vmem:[%s0 + $0x10] sm:$0xff]
  %v17 = vld [vmem:[%s0 + $0x18] sm:$0xff]
  %v18 = vld [vmem:[%s0 + $0x20] sm:$0xff]
  %v19 = vld [vmem:[%s0 + $0x28] sm:$0xff]
  %v20 = vld [vmem:[%s0 + $0x30] sm:$0xff]
  %v21 = vld [vmem:[%s0 + $0x38] sm:$0xff]
  %v22 = vld [vmem:[%s0 + $0x40] sm:$0xff]
  %v23 = vld [vmem:[%s0 + $0x48] sm:$0xff]
  %v24 = vld [vmem:[%s0 + $0x50] sm:$0xff]
  %v25 = vld [vmem:[%s0 + $0x58] sm:$0xff]
  %v26 = vld [vmem:[%s0 + $0x60] sm:$0xff]
  %v27 = vld [vmem:[%s0 + $0x68] sm:$0xff]
  %v28 = vld [vmem:[%s0 + $0x70] sm:$0xff]
  %v29 = vld [vmem:[%s0 + $0x78] sm:$0xff]
  %v30 = vld [vmem:[%s1] sm:$0xff]
  %v31 = vld [vmem:[%s1 + $0x8] sm:$0xff]
  %v32 = vld [vmem:[%s1 + $0x10] sm:$0xff]
  %v33 = vld [vmem:[%s1 + $0x18] sm:$0xff]
  %s34 = scalar_lea.vmem %s0, 128
  %v35 = vld [vmem:[%s34] sm:$0xff]
  %v36 = vld [vmem:[%s34 + $0x8] sm:$0xff]
  %v37 = vld [vmem:[%s34 + $0x10] sm:$0xff]
  %v38 = vld [vmem:[%s34 + $0x18] sm:$0xff]
  %v39 = vld [vmem:[%s34 + $0x20] sm:$0xff]
  %v40 = vld [vmem:[%s34 + $0x28] sm:$0xff]
  %v41 = vld [vmem:[%s34 + $0x30] sm:$0xff]
  %v42 = vld [vmem:[%s34 + $0x38] sm:$0xff]
  %v43 = vld [vmem:[%s34 + $0x40] sm:$0xff]
  %v44 = vld [vmem:[%s34 + $0x48] sm:$0xff]
  %v45 = vld [vmem:[%s34 + $0x50] sm:$0xff]
  %v46 = vld [vmem:[%s34 + $0x58] sm:$0xff]
  %v47 = vld [vmem:[%s34 + $0x60] sm:$0xff]
  %v48 = vld [vmem:[%s34 + $0x68] sm:$0xff]
  %v49 = vld [vmem:[%s34 + $0x70] sm:$0xff]
  %v50 = vld [vmem:[%s34 + $0x78] sm:$0xff]
  %s51 = scalar_lea.vmem %s1, 32
  %v52 = vld [vmem:[%s51] sm:$0xff]
  %v53 = vld [vmem:[%s51 + $0x8] sm:$0xff]
  %v54 = vld [vmem:[%s51 + $0x10] sm:$0xff]
  %v55 = vld [vmem:[%s51 + $0x18] sm:$0xff]
  %vm56 = vcmask 261120
  %v58 = vsel %vm56, %v35, 0
  %v61 = vsel %vm56, %v36, 0
  %v64 = vsel %vm56, %v37, 0
  %v67 = vsel %vm56, %v38, 0
  %v70 = vsel %vm56, %v39, 0
  %v73 = vsel %vm56, %v40, 0
  %v76 = vsel %vm56, %v41, 0
  %v79 = vsel %vm56, %v42, 0
  %v82 = vsel %vm56, %v43, 0
  %v85 = vsel %vm56, %v44, 0
  %v88 = vsel %vm56, %v45, 0
  %v91 = vsel %vm56, %v46, 0
  %v94 = vsel %vm56, %v47, 0
  %v97 = vsel %vm56, %v48, 0
  %v100 = vsel %vm56, %v49, 0
  %v103 = vsel %vm56, %v50, 0
  %105 = vmatprep.subr.mxu0 0.0
  %106 = vmatpush1.msra.mxu0 0.0
  %107 = vmatprep.subr.mxu0 0.0
  %108 = vmatpush1.msra.mxu0 0.0
  %109 = vmatprep.subr.mxu0 0.0
  %110 = vmatpush1.msra.mxu0 0.0
  %111 = vmatprep.subr.mxu0 0.0
  %112 = vmatpush1.msra.mxu0 0.0
  %113 = vmatprep.subr.mxu0 0.0
  %114 = vmatpush1.msra.mxu0 0.0
  %115 = vmatprep.subr.mxu0 0.0
  %116 = vmatpush1.msra.mxu0 0.0
  %117 = vmatprep.subr.mxu0 0.0
  %118 = vmatpush1.msra.mxu0 0.0
  %119 = vmatprep.subr.mxu0 0.0
  %120 = vmatpush1.msra.mxu0 0.0
  %121 = vmatprep.subr.mxu0 0.0
  %122 = vmatpush1.msra.mxu0 0.0
  %123 = vmatprep.subr.mxu0 0.0
  %124 = vmatpush1.msra.mxu0 0.0
  %125 = vmatprep.subr.mxu0 0.0
  %126 = vmatpush1.msra.mxu0 0.0
  %127 = vmatprep.subr.mxu0 0.0
  %128 = vmatpush1.msra.mxu0 0.0
  %129 = vmatprep.subr.mxu0 0.0
  %130 = vmatpush1.msra.mxu0 %v55
  %131 = vmatprep.subr.mxu0 0.0
  %132 = vmatpush1.msra.mxu0 %v54
  %133 = vmatprep.subr.mxu0 0.0
  %134 = vmatpush1.msra.mxu0 %v53
  %135 = vmatprep.subr.mxu0 0.0
  %136 = vmatpush1.msra.mxu0 %v52
  %137 = vmatprep.subr.mxu0 0.0
  %138 = vmatpush2.msra.mxu0 0.0
  %139 = vmatprep.subr.mxu0 0.0
  %140 = vmatpush2.msra.mxu0 0.0
  %141 = vmatprep.subr.mxu0 0.0
  %142 = vmatpush2.msra.mxu0 0.0
  %143 = vmatprep.subr.mxu0 0.0
  %144 = vmatpush2.msra.mxu0 0.0
  %145 = vmatprep.subr.mxu0 0.0
  %146 = vmatpush2.msra.mxu0 0.0
  %147 = vmatprep.subr.mxu0 0.0
  %148 = vmatpush2.msra.mxu0 0.0
  %149 = vmatprep.subr.mxu0 0.0
  %150 = vmatpush2.msra.mxu0 0.0
  %151 = vmatprep.subr.mxu0 0.0
  %152 = vmatpush2.msra.mxu0 0.0
  %153 = vmatprep.subr.mxu0 0.0
  %154 = vmatpush2.msra.mxu0 0.0
  %155 = vmatprep.subr.mxu0 0.0
  %156 = vmatpush2.msra.mxu0 0.0
  %157 = vmatprep.subr.mxu0 0.0
  %158 = vmatpush2.msra.mxu0 0.0
  %159 = vmatprep.subr.mxu0 0.0
  %160 = vmatpush2.msra.mxu0 0.0
  %161 = vmatprep.subr.mxu0 0.0
  %162 = vmatpush2.msra.mxu0 0.0
  %163 = vmatprep.subr.mxu0 0.0
  %164 = vmatpush2.msra.mxu0 0.0
  %165 = vmatprep.subr.mxu0 0.0
  %166 = vmatpush2.msra.mxu0 0.0
  %167 = vmatprep.subr.mxu0 0.0
  %168 = vmatpush2.msra.mxu0 0.0
  %169 = vmatprep.mubr.f32.mxu0 0.0
  %170 = vmatmul.mubr.f32.gmra.mxu0 %v58
  %v171 = vpop.f32.mrf.mxu0
  %v172 = vadd.f32 0.0, %v171
  %v173 = vpop.f32.mrf.mxu0
  %174 = vmatprep.mubr.f32.mxu0 0.0
  %175 = vmatmul.mubr.f32.gmra.mxu0 %v61
  %v176 = vpop.f32.mrf.mxu0
  %v177 = vadd.f32 0.0, %v176
  %v178 = vpop.f32.mrf.mxu0
  %179 = vmatprep.mubr.f32.mxu0 0.0
  %180 = vmatmul.mubr.f32.gmra.mxu0 %v64
  %v181 = vpop.f32.mrf.mxu0
  %v182 = vadd.f32 0.0, %v181
  %v183 = vpop.f32.mrf.mxu0
  %184 = vmatprep.mubr.f32.mxu0 0.0
  %185 = vmatmul.mubr.f32.gmra.mxu0 %v67
  %v186 = vpop.f32.mrf.mxu0
  %v187 = vadd.f32 0.0, %v186
  %v188 = vpop.f32.mrf.mxu0
  %189 = vmatprep.mubr.f32.mxu0 0.0
  %190 = vmatmul.mubr.f32.gmra.mxu0 %v70
  %v191 = vpop.f32.mrf.mxu0
  %v192 = vadd.f32 0.0, %v191
  %v193 = vpop.f32.mrf.mxu0
  %194 = vmatprep.mubr.f32.mxu0 0.0
  %195 = vmatmul.mubr.f32.gmra.mxu0 %v73
  %v196 = vpop.f32.mrf.mxu0
  %v197 = vadd.f32 0.0, %v196
  %v198 = vpop.f32.mrf.mxu0
  %199 = vmatprep.mubr.f32.mxu0 0.0
  %200 = vmatmul.mubr.f32.gmra.mxu0 %v76
  %v201 = vpop.f32.mrf.mxu0
  %v202 = vadd.f32 0.0, %v201
  %v203 = vpop.f32.mrf.mxu0
  %204 = vmatprep.mubr.f32.mxu0 0.0
  %205 = vmatmul.mubr.f32.gmra.mxu0 %v79
  %v206 = vpop.f32.mrf.mxu0
  %v207 = vadd.f32 0.0, %v206
  %v208 = vpop.f32.mrf.mxu0
  %209 = vmatprep.mubr.f32.mxu0 0.0
  %210 = vmatmul.mubr.f32.gmra.mxu0 %v82
  %v211 = vpop.f32.mrf.mxu0
  %v212 = vadd.f32 0.0, %v211
  %v213 = vpop.f32.mrf.mxu0
  %214 = vmatprep.mubr.f32.mxu0 0.0
  %215 = vmatmul.mubr.f32.gmra.mxu0 %v85
  %v216 = vpop.f32.mrf.mxu0
  %v217 = vadd.f32 0.0, %v216
  %v218 = vpop.f32.mrf.mxu0
  %219 = vmatprep.mubr.f32.mxu0 0.0
  %220 = vmatmul.mubr.f32.gmra.mxu0 %v88
  %v221 = vpop.f32.mrf.mxu0
  %v222 = vadd.f32 0.0, %v221
  %v223 = vpop.f32.mrf.mxu0
  %224 = vmatprep.mubr.f32.mxu0 0.0
  %225 = vmatmul.mubr.f32.gmra.mxu0 %v91
  %v226 = vpop.f32.mrf.mxu0
  %v227 = vadd.f32 0.0, %v226
  %v228 = vpop.f32.mrf.mxu0
  %229 = vmatprep.mubr.f32.mxu0 0.0
  %230 = vmatmul.mubr.f32.gmra.mxu0 %v94
  %v231 = vpop.f32.mrf.mxu0
  %v232 = vadd.f32 0.0, %v231
  %v233 = vpop.f32.mrf.mxu0
  %234 = vmatprep.mubr.f32.mxu0 0.0
  %235 = vmatmul.mubr.f32.gmra.mxu0 %v97
  %v236 = vpop.f32.mrf.mxu0
  %v237 = vadd.f32 0.0, %v236
  %v238 = vpop.f32.mrf.mxu0
  %239 = vmatprep.mubr.f32.mxu0 0.0
  %240 = vmatmul.mubr.f32.gmra.mxu0 %v100
  %v241 = vpop.f32.mrf.mxu0
  %v242 = vadd.f32 0.0, %v241
  %v243 = vpop.f32.mrf.mxu0
  %244 = vmatprep.mubr.f32.mxu0 0.0
  %245 = vmatmul.mubr.f32.gmra.mxu0 %v103
  %v246 = vpop.f32.mrf.mxu0
  %v247 = vadd.f32 0.0, %v246
  %v248 = vpop.f32.mrf.mxu0
  %249 = vdwg.mxu0
  %v251 = vsel %vm56, %v14, 0
  %v254 = vsel %vm56, %v15, 0
  %v257 = vsel %vm56, %v16, 0
  %v260 = vsel %vm56, %v17, 0
  %v263 = vsel %vm56, %v18, 0
  %v266 = vsel %vm56, %v19, 0
  %v269 = vsel %vm56, %v20, 0
  %v272 = vsel %vm56, %v21, 0
  %v275 = vsel %vm56, %v22, 0
  %v278 = vsel %vm56, %v23, 0
  %v281 = vsel %vm56, %v24, 0
  %v284 = vsel %vm56, %v25, 0
  %v287 = vsel %vm56, %v26, 0
  %v290 = vsel %vm56, %v27, 0
  %v293 = vsel %vm56, %v28, 0
  %v296 = vsel %vm56, %v29, 0
  %298 = vmatprep.subr.mxu0 0.0
  %299 = vmatpush1.msra.mxu0 0.0
  %300 = vmatprep.subr.mxu0 0.0
  %301 = vmatpush1.msra.mxu0 0.0
  %302 = vmatprep.subr.mxu0 0.0
  %303 = vmatpush1.msra.mxu0 0.0
  %304 = vmatprep.subr.mxu0 0.0
  %305 = vmatpush1.msra.mxu0 0.0
  %306 = vmatprep.subr.mxu0 0.0
  %307 = vmatpush1.msra.mxu0 0.0
  %308 = vmatprep.subr.mxu0 0.0
  %309 = vmatpush1.msra.mxu0 0.0
  %310 = vmatprep.subr.mxu0 0.0
  %311 = vmatpush1.msra.mxu0 0.0
  %312 = vmatprep.subr.mxu0 0.0
  %313 = vmatpush1.msra.mxu0 0.0
  %314 = vmatprep.subr.mxu0 0.0
  %315 = vmatpush1.msra.mxu0 0.0
  %316 = vmatprep.subr.mxu0 0.0
  %317 = vmatpush1.msra.mxu0 0.0
  %318 = vmatprep.subr.mxu0 0.0
  %319 = vmatpush1.msra.mxu0 0.0
  %320 = vmatprep.subr.mxu0 0.0
  %321 = vmatpush1.msra.mxu0 0.0
  %322 = vmatprep.subr.mxu0 0.0
  %323 = vmatpush1.msra.mxu0 %v33
  %324 = vmatprep.subr.mxu0 0.0
  %325 = vmatpush1.msra.mxu0 %v32
  %326 = vmatprep.subr.mxu0 0.0
  %327 = vmatpush1.msra.mxu0 %v31
  %328 = vmatprep.subr.mxu0 0.0
  %329 = vmatpush1.msra.mxu0 %v30
  %330 = vmatprep.subr.mxu0 0.0
  %331 = vmatpush2.msra.mxu0 0.0
  %332 = vmatprep.subr.mxu0 0.0
  %333 = vmatpush2.msra.mxu0 0.0
  %334 = vmatprep.subr.mxu0 0.0
  %335 = vmatpush2.msra.mxu0 0.0
  %336 = vmatprep.subr.mxu0 0.0
  %337 = vmatpush2.msra.mxu0 0.0
  %338 = vmatprep.subr.mxu0 0.0
  %339 = vmatpush2.msra.mxu0 0.0
  %340 = vmatprep.subr.mxu0 0.0
  %341 = vmatpush2.msra.mxu0 0.0
  %342 = vmatprep.subr.mxu0 0.0
  %343 = vmatpush2.msra.mxu0 0.0
  %344 = vmatprep.subr.mxu0 0.0
  %345 = vmatpush2.msra.mxu0 0.0
  %346 = vmatprep.subr.mxu0 0.0
  %347 = vmatpush2.msra.mxu0 0.0
  %348 = vmatprep.subr.mxu0 0.0
  %349 = vmatpush2.msra.mxu0 0.0
  %350 = vmatprep.subr.mxu0 0.0
  %351 = vmatpush2.msra.mxu0 0.0
  %352 = vmatprep.subr.mxu0 0.0
  %353 = vmatpush2.msra.mxu0 0.0
  %354 = vmatprep.subr.mxu0 0.0
  %355 = vmatpush2.msra.mxu0 0.0
  %356 = vmatprep.subr.mxu0 0.0
  %357 = vmatpush2.msra.mxu0 0.0
  %358 = vmatprep.subr.mxu0 0.0
  %359 = vmatpush2.msra.mxu0 0.0
  %360 = vmatprep.subr.mxu0 0.0
  %361 = vmatpush2.msra.mxu0 0.0
  %362 = vmatprep.mubr.f32.mxu0 0.0
  %363 = vmatmul.mubr.f32.gmra.mxu0 %v251
  %v364 = vpop.f32.mrf.mxu0
  %v365 = vadd.f32 %v172, %v364
  %v366 = vpop.f32.mrf.mxu0
  %367 = vmatprep.mubr.f32.mxu0 0.0
  %368 = vmatmul.mubr.f32.gmra.mxu0 %v254
  %v369 = vpop.f32.mrf.mxu0
  %v370 = vadd.f32 %v177, %v369
  %v371 = vpop.f32.mrf.mxu0
  %372 = vmatprep.mubr.f32.mxu0 0.0
  %373 = vmatmul.mubr.f32.gmra.mxu0 %v257
  %v374 = vpop.f32.mrf.mxu0
  %v375 = vadd.f32 %v182, %v374
  %v376 = vpop.f32.mrf.mxu0
  %377 = vmatprep.mubr.f32.mxu0 0.0
  %378 = vmatmul.mubr.f32.gmra.mxu0 %v260
  %v379 = vpop.f32.mrf.mxu0
  %v380 = vadd.f32 %v187, %v379
  %v381 = vpop.f32.mrf.mxu0
  %382 = vmatprep.mubr.f32.mxu0 0.0
  %383 = vmatmul.mubr.f32.gmra.mxu0 %v263
  %v384 = vpop.f32.mrf.mxu0
  %v385 = vadd.f32 %v192, %v384
  %v386 = vpop.f32.mrf.mxu0
  %387 = vmatprep.mubr.f32.mxu0 0.0
  %388 = vmatmul.mubr.f32.gmra.mxu0 %v266
  %v389 = vpop.f32.mrf.mxu0
  %v390 = vadd.f32 %v197, %v389
  %v391 = vpop.f32.mrf.mxu0
  %392 = vmatprep.mubr.f32.mxu0 0.0
  %393 = vmatmul.mubr.f32.gmra.mxu0 %v269
  %v394 = vpop.f32.mrf.mxu0
  %v395 = vadd.f32 %v202, %v394
  %v396 = vpop.f32.mrf.mxu0
  %397 = vmatprep.mubr.f32.mxu0 0.0
  %398 = vmatmul.mubr.f32.gmra.mxu0 %v272
  %v399 = vpop.f32.mrf.mxu0
  %v400 = vadd.f32 %v207, %v399
  %v401 = vpop.f32.mrf.mxu0
  %402 = vmatprep.mubr.f32.mxu0 0.0
  %403 = vmatmul.mubr.f32.gmra.mxu0 %v275
  %v404 = vpop.f32.mrf.mxu0
  %v405 = vadd.f32 %v212, %v404
  %v406 = vpop.f32.mrf.mxu0
  %407 = vmatprep.mubr.f32.mxu0 0.0
  %408 = vmatmul.mubr.f32.gmra.mxu0 %v278
  %v409 = vpop.f32.mrf.mxu0
  %v410 = vadd.f32 %v217, %v409
  %v411 = vpop.f32.mrf.mxu0
  %412 = vmatprep.mubr.f32.mxu0 0.0
  %413 = vmatmul.mubr.f32.gmra.mxu0 %v281
  %v414 = vpop.f32.mrf.mxu0
  %v415 = vadd.f32 %v222, %v414
  %v416 = vpop.f32.mrf.mxu0
  %417 = vmatprep.mubr.f32.mxu0 0.0
  %418 = vmatmul.mubr.f32.gmra.mxu0 %v284
  %v419 = vpop.f32.mrf.mxu0
  %v420 = vadd.f32 %v227, %v419
  %v421 = vpop.f32.mrf.mxu0
  %422 = vmatprep.mubr.f32.mxu0 0.0
  %423 = vmatmul.mubr.f32.gmra.mxu0 %v287
  %v424 = vpop.f32.mrf.mxu0
  %v425 = vadd.f32 %v232, %v424
  %v426 = vpop.f32.mrf.mxu0
  %427 = vmatprep.mubr.f32.mxu0 0.0
  %428 = vmatmul.mubr.f32.gmra.mxu0 %v290
  %v429 = vpop.f32.mrf.mxu0
  %v430 = vadd.f32 %v237, %v429
  %v431 = vpop.f32.mrf.mxu0
  %432 = vmatprep.mubr.f32.mxu0 0.0
  %433 = vmatmul.mubr.f32.gmra.mxu0 %v293
  %v434 = vpop.f32.mrf.mxu0
  %v435 = vadd.f32 %v242, %v434
  %v436 = vpop.f32.mrf.mxu0
  %437 = vmatprep.mubr.f32.mxu0 0.0
  %438 = vmatmul.mubr.f32.gmra.mxu0 %v296
  %v439 = vpop.f32.mrf.mxu0
  %v440 = vadd.f32 %v247, %v439
  %v441 = vpop.f32.mrf.mxu0
  %442 = vdwg.mxu0
  %s443 = scalar_lea.vmem %s0, 256
  %v444 = vld [vmem:[%s443] sm:$0xff]
  %v445 = vld [vmem:[%s443 + $0x8] sm:$0xff]
  %v446 = vld [vmem:[%s443 + $0x10] sm:$0xff]
  %v447 = vld [vmem:[%s443 + $0x18] sm:$0xff]
  %v448 = vld [vmem:[%s443 + $0x20] sm:$0xff]
  %v449 = vld [vmem:[%s443 + $0x28] sm:$0xff]
  %v450 = vld [vmem:[%s443 + $0x30] sm:$0xff]
  %v451 = vld [vmem:[%s443 + $0x38] sm:$0xff]
  %v452 = vld [vmem:[%s443 + $0x40] sm:$0xff]
  %v453 = vld [vmem:[%s443 + $0x48] sm:$0xff]
  %v454 = vld [vmem:[%s443 + $0x50] sm:$0xff]
  %v455 = vld [vmem:[%s443 + $0x58] sm:$0xff]
  %v456 = vld [vmem:[%s443 + $0x60] sm:$0xff]
  %v457 = vld [vmem:[%s443 + $0x68] sm:$0xff]
  %v458 = vld [vmem:[%s443 + $0x70] sm:$0xff]
  %v459 = vld [vmem:[%s443 + $0x78] sm:$0xff]
  %s460 = scalar_lea.vmem %s1, 64
  %v461 = vld [vmem:[%s460] sm:$0xff]
  %v462 = vld [vmem:[%s460 + $0x8] sm:$0xff]
  %v463 = vld [vmem:[%s460 + $0x10] sm:$0xff]
  %v464 = vld [vmem:[%s460 + $0x18] sm:$0xff]
  %v466 = vsel %vm56, %v444, 0
  %v469 = vsel %vm56, %v445, 0
  %v472 = vsel %vm56, %v446, 0
  %v475 = vsel %vm56, %v447, 0
  %v478 = vsel %vm56, %v448, 0
  %v481 = vsel %vm56, %v449, 0
  %v484 = vsel %vm56, %v450, 0
  %v487 = vsel %vm56, %v451, 0
  %v490 = vsel %vm56, %v452, 0
  %v493 = vsel %vm56, %v453, 0
  %v496 = vsel %vm56, %v454, 0
  %v499 = vsel %vm56, %v455, 0
  %v502 = vsel %vm56, %v456, 0
  %v505 = vsel %vm56, %v457, 0
  %v508 = vsel %vm56, %v458, 0
  %v511 = vsel %vm56, %v459, 0
  %513 = vmatprep.subr.mxu0 0.0
  %514 = vmatpush1.msra.mxu0 0.0
  %515 = vmatprep.subr.mxu0 0.0
  %516 = vmatpush1.msra.mxu0 0.0
  %517 = vmatprep.subr.mxu0 0.0
  %518 = vmatpush1.msra.mxu0 0.0
  %519 = vmatprep.subr.mxu0 0.0
  %520 = vmatpush1.msra.mxu0 0.0
  %521 = vmatprep.subr.mxu0 0.0
  %522 = vmatpush1.msra.mxu0 0.0
  %523 = vmatprep.subr.mxu0 0.0
  %524 = vmatpush1.msra.mxu0 0.0
  %525 = vmatprep.subr.mxu0 0.0
  %526 = vmatpush1.msra.mxu0 0.0
  %527 = vmatprep.subr.mxu0 0.0
  %528 = vmatpush1.msra.mxu0 0.0
  %529 = vmatprep.subr.mxu0 0.0
  %530 = vmatpush1.msra.mxu0 0.0
  %531 = vmatprep.subr.mxu0 0.0
  %532 = vmatpush1.msra.mxu0 0.0
  %533 = vmatprep.subr.mxu0 0.0
  %534 = vmatpush1.msra.mxu0 0.0
  %535 = vmatprep.subr.mxu0 0.0
  %536 = vmatpush1.msra.mxu0 0.0
  %537 = vmatprep.subr.mxu0 0.0
  %538 = vmatpush1.msra.mxu0 %v464
  %539 = vmatprep.subr.mxu0 0.0
  %540 = vmatpush1.msra.mxu0 %v463
  %541 = vmatprep.subr.mxu0 0.0
  %542 = vmatpush1.msra.mxu0 %v462
  %543 = vmatprep.subr.mxu0 0.0
  %544 = vmatpush1.msra.mxu0 %v461
  %545 = vmatprep.subr.mxu0 0.0
  %546 = vmatpush2.msra.mxu0 0.0
  %547 = vmatprep.subr.mxu0 0.0
  %548 = vmatpush2.msra.mxu0 0.0
  %549 = vmatprep.subr.mxu0 0.0
  %550 = vmatpush2.msra.mxu0 0.0
  %551 = vmatprep.subr.mxu0 0.0
  %552 = vmatpush2.msra.mxu0 0.0
  %553 = vmatprep.subr.mxu0 0.0
  %554 = vmatpush2.msra.mxu0 0.0
  %555 = vmatprep.subr.mxu0 0.0
  %556 = vmatpush2.msra.mxu0 0.0
  %557 = vmatprep.subr.mxu0 0.0
  %558 = vmatpush2.msra.mxu0 0.0
  %559 = vmatprep.subr.mxu0 0.0
  %560 = vmatpush2.msra.mxu0 0.0
  %561 = vmatprep.subr.mxu0 0.0
  %562 = vmatpush2.msra.mxu0 0.0
  %563 = vmatprep.subr.mxu0 0.0
  %564 = vmatpush2.msra.mxu0 0.0
  %565 = vmatprep.subr.mxu0 0.0
  %566 = vmatpush2.msra.mxu0 0.0
  %567 = vmatprep.subr.mxu0 0.0
  %568 = vmatpush2.msra.mxu0 0.0
  %569 = vmatprep.subr.mxu0 0.0
  %570 = vmatpush2.msra.mxu0 0.0
  %571 = vmatprep.subr.mxu0 0.0
  %572 = vmatpush2.msra.mxu0 0.0
  %573 = vmatprep.subr.mxu0 0.0
  %574 = vmatpush2.msra.mxu0 0.0
  %575 = vmatprep.subr.mxu0 0.0
  %576 = vmatpush2.msra.mxu0 0.0
  %577 = vmatprep.mubr.f32.mxu0 0.0
  %578 = vmatmul.mubr.f32.gmra.mxu0 %v466
  %v579 = vpop.f32.mrf.mxu0
  %v580 = vadd.f32 0.0, %v579
  %v581 = vpop.f32.mrf.mxu0
  %582 = vmatprep.mubr.f32.mxu0 0.0
  %583 = vmatmul.mubr.f32.gmra.mxu0 %v469
  %v584 = vpop.f32.mrf.mxu0
  %v585 = vadd.f32 0.0, %v584
  %v586 = vpop.f32.mrf.mxu0
  %587 = vmatprep.mubr.f32.mxu0 0.0
  %588 = vmatmul.mubr.f32.gmra.mxu0 %v472
  %v589 = vpop.f32.mrf.mxu0
  %v590 = vadd.f32 0.0, %v589
  %v591 = vpop.f32.mrf.mxu0
  %592 = vmatprep.mubr.f32.mxu0 0.0
  %593 = vmatmul.mubr.f32.gmra.mxu0 %v475
  %v594 = vpop.f32.mrf.mxu0
  %v595 = vadd.f32 0.0, %v594
  %v596 = vpop.f32.mrf.mxu0
  %597 = vmatprep.mubr.f32.mxu0 0.0
  %598 = vmatmul.mubr.f32.gmra.mxu0 %v478
  %v599 = vpop.f32.mrf.mxu0
  %v600 = vadd.f32 0.0, %v599
  %v601 = vpop.f32.mrf.mxu0
  %602 = vmatprep.mubr.f32.mxu0 0.0
  %603 = vmatmul.mubr.f32.gmra.mxu0 %v481
  %v604 = vpop.f32.mrf.mxu0
  %v605 = vadd.f32 0.0, %v604
  %v606 = vpop.f32.mrf.mxu0
  %607 = vmatprep.mubr.f32.mxu0 0.0
  %608 = vmatmul.mubr.f32.gmra.mxu0 %v484
  %v609 = vpop.f32.mrf.mxu0
  %v610 = vadd.f32 0.0, %v609
  %v611 = vpop.f32.mrf.mxu0
  %612 = vmatprep.mubr.f32.mxu0 0.0
  %613 = vmatmul.mubr.f32.gmra.mxu0 %v487
  %v614 = vpop.f32.mrf.mxu0
  %v615 = vadd.f32 0.0, %v614
  %v616 = vpop.f32.mrf.mxu0
  %617 = vmatprep.mubr.f32.mxu0 0.0
  %618 = vmatmul.mubr.f32.gmra.mxu0 %v490
  %v619 = vpop.f32.mrf.mxu0
  %v620 = vadd.f32 0.0, %v619
  %v621 = vpop.f32.mrf.mxu0
  %622 = vmatprep.mubr.f32.mxu0 0.0
  %623 = vmatmul.mubr.f32.gmra.mxu0 %v493
  %v624 = vpop.f32.mrf.mxu0
  %v625 = vadd.f32 0.0, %v624
  %v626 = vpop.f32.mrf.mxu0
  %627 = vmatprep.mubr.f32.mxu0 0.0
  %628 = vmatmul.mubr.f32.gmra.mxu0 %v496
  %v629 = vpop.f32.mrf.mxu0
  %v630 = vadd.f32 0.0, %v629
  %v631 = vpop.f32.mrf.mxu0
  %632 = vmatprep.mubr.f32.mxu0 0.0
  %633 = vmatmul.mubr.f32.gmra.mxu0 %v499
  %v634 = vpop.f32.mrf.mxu0
  %v635 = vadd.f32 0.0, %v634
  %v636 = vpop.f32.mrf.mxu0
  %637 = vmatprep.mubr.f32.mxu0 0.0
  %638 = vmatmul.mubr.f32.gmra.mxu0 %v502
  %v639 = vpop.f32.mrf.mxu0
  %v640 = vadd.f32 0.0, %v639
  %v641 = vpop.f32.mrf.mxu0
  %642 = vmatprep.mubr.f32.mxu0 0.0
  %643 = vmatmul.mubr.f32.gmra.mxu0 %v505
  %v644 = vpop.f32.mrf.mxu0
  %v645 = vadd.f32 0.0, %v644
  %v646 = vpop.f32.mrf.mxu0
  %647 = vmatprep.mubr.f32.mxu0 0.0
  %648 = vmatmul.mubr.f32.gmra.mxu0 %v508
  %v649 = vpop.f32.mrf.mxu0
  %v650 = vadd.f32 0.0, %v649
  %v651 = vpop.f32.mrf.mxu0
  %652 = vmatprep.mubr.f32.mxu0 0.0
  %653 = vmatmul.mubr.f32.gmra.mxu0 %v511
  %v654 = vpop.f32.mrf.mxu0
  %v655 = vadd.f32 0.0, %v654
  %v656 = vpop.f32.mrf.mxu0
  %657 = vdwg.mxu0
  %v658 = vadd.f32 %v365, %v580
  %v659 = vadd.f32 %v370, %v585
  %v660 = vadd.f32 %v375, %v590
  %v661 = vadd.f32 %v380, %v595
  %v662 = vadd.f32 %v385, %v600
  %v663 = vadd.f32 %v390, %v605
  %v664 = vadd.f32 %v395, %v610
  %v665 = vadd.f32 %v400, %v615
  %v666 = vadd.f32 %v405, %v620
  %v667 = vadd.f32 %v410, %v625
  %v668 = vadd.f32 %v415, %v630
  %v669 = vadd.f32 %v420, %v635
  %v670 = vadd.f32 %v425, %v640
  %v671 = vadd.f32 %v430, %v645
  %v672 = vadd.f32 %v435, %v650
  %v673 = vadd.f32 %v440, %v655
  %s674 = scalar_lea.vmem %s0, 384
  %v675 = vld [vmem:[%s674] sm:$0xff]
  %v676 = vld [vmem:[%s674 + $0x8] sm:$0xff]
  %v677 = vld [vmem:[%s674 + $0x10] sm:$0xff]
  %v678 = vld [vmem:[%s674 + $0x18] sm:$0xff]
  %v679 = vld [vmem:[%s674 + $0x20] sm:$0xff]
  %v680 = vld [vmem:[%s674 + $0x28] sm:$0xff]
  %v681 = vld [vmem:[%s674 + $0x30] sm:$0xff]
  %v682 = vld [vmem:[%s674 + $0x38] sm:$0xff]
  %v683 = vld [vmem:[%s674 + $0x40] sm:$0xff]
  %v684 = vld [vmem:[%s674 + $0x48] sm:$0xff]
  %v685 = vld [vmem:[%s674 + $0x50] sm:$0xff]
  %v686 = vld [vmem:[%s674 + $0x58] sm:$0xff]
  %v687 = vld [vmem:[%s674 + $0x60] sm:$0xff]
  %v688 = vld [vmem:[%s674 + $0x68] sm:$0xff]
  %v689 = vld [vmem:[%s674 + $0x70] sm:$0xff]
  %v690 = vld [vmem:[%s674 + $0x78] sm:$0xff]
  %s691 = scalar_lea.vmem %s1, 96
  %v692 = vld [vmem:[%s691] sm:$0xff]
  %v693 = vld [vmem:[%s691 + $0x8] sm:$0xff]
  %v694 = vld [vmem:[%s691 + $0x10] sm:$0xff]
  %v695 = vld [vmem:[%s691 + $0x18] sm:$0xff]
  %v697 = vsel %vm56, %v675, 0
  %v700 = vsel %vm56, %v676, 0
  %v703 = vsel %vm56, %v677, 0
  %v706 = vsel %vm56, %v678, 0
  %v709 = vsel %vm56, %v679, 0
  %v712 = vsel %vm56, %v680, 0
  %v715 = vsel %vm56, %v681, 0
  %v718 = vsel %vm56, %v682, 0
  %v721 = vsel %vm56, %v683, 0
  %v724 = vsel %vm56, %v684, 0
  %v727 = vsel %vm56, %v685, 0
  %v730 = vsel %vm56, %v686, 0
  %v733 = vsel %vm56, %v687, 0
  %v736 = vsel %vm56, %v688, 0
  %v739 = vsel %vm56, %v689, 0
  %v742 = vsel %vm56, %v690, 0
  %744 = vmatprep.subr.mxu0 0.0
  %745 = vmatpush1.msra.mxu0 0.0
  %746 = vmatprep.subr.mxu0 0.0
  %747 = vmatpush1.msra.mxu0 0.0
  %748 = vmatprep.subr.mxu0 0.0
  %749 = vmatpush1.msra.mxu0 0.0
  %750 = vmatprep.subr.mxu0 0.0
  %751 = vmatpush1.msra.mxu0 0.0
  %752 = vmatprep.subr.mxu0 0.0
  %753 = vmatpush1.msra.mxu0 0.0
  %754 = vmatprep.subr.mxu0 0.0
  %755 = vmatpush1.msra.mxu0 0.0
  %756 = vmatprep.subr.mxu0 0.0
  %757 = vmatpush1.msra.mxu0 0.0
  %758 = vmatprep.subr.mxu0 0.0
  %759 = vmatpush1.msra.mxu0 0.0
  %760 = vmatprep.subr.mxu0 0.0
  %761 = vmatpush1.msra.mxu0 0.0
  %762 = vmatprep.subr.mxu0 0.0
  %763 = vmatpush1.msra.mxu0 0.0
  %764 = vmatprep.subr.mxu0 0.0
  %765 = vmatpush1.msra.mxu0 0.0
  %766 = vmatprep.subr.mxu0 0.0
  %767 = vmatpush1.msra.mxu0 0.0
  %768 = vmatprep.subr.mxu0 0.0
  %769 = vmatpush1.msra.mxu0 %v695
  %770 = vmatprep.subr.mxu0 0.0
  %771 = vmatpush1.msra.mxu0 %v694
  %772 = vmatprep.subr.mxu0 0.0
  %773 = vmatpush1.msra.mxu0 %v693
  %774 = vmatprep.subr.mxu0 0.0
  %775 = vmatpush1.msra.mxu0 %v692
  %776 = vmatprep.subr.mxu0 0.0
  %777 = vmatpush2.msra.mxu0 0.0
  %778 = vmatprep.subr.mxu0 0.0
  %779 = vmatpush2.msra.mxu0 0.0
  %780 = vmatprep.subr.mxu0 0.0
  %781 = vmatpush2.msra.mxu0 0.0
  %782 = vmatprep.subr.mxu0 0.0
  %783 = vmatpush2.msra.mxu0 0.0
  %784 = vmatprep.subr.mxu0 0.0
  %785 = vmatpush2.msra.mxu0 0.0
  %786 = vmatprep.subr.mxu0 0.0
  %787 = vmatpush2.msra.mxu0 0.0
  %788 = vmatprep.subr.mxu0 0.0
  %789 = vmatpush2.msra.mxu0 0.0
  %790 = vmatprep.subr.mxu0 0.0
  %791 = vmatpush2.msra.mxu0 0.0
  %792 = vmatprep.subr.mxu0 0.0
  %793 = vmatpush2.msra.mxu0 0.0
  %794 = vmatprep.subr.mxu0 0.0
  %795 = vmatpush2.msra.mxu0 0.0
  %796 = vmatprep.subr.mxu0 0.0
  %797 = vmatpush2.msra.mxu0 0.0
  %798 = vmatprep.subr.mxu0 0.0
  %799 = vmatpush2.msra.mxu0 0.0
  %800 = vmatprep.subr.mxu0 0.0
  %801 = vmatpush2.msra.mxu0 0.0
  %802 = vmatprep.subr.mxu0 0.0
  %803 = vmatpush2.msra.mxu0 0.0
  %804 = vmatprep.subr.mxu0 0.0
  %805 = vmatpush2.msra.mxu0 0.0
  %806 = vmatprep.subr.mxu0 0.0
  %807 = vmatpush2.msra.mxu0 0.0
  %808 = vmatprep.mubr.f32.mxu0 0.0
  %809 = vmatmul.mubr.f32.gmra.mxu0 %v697
  %v810 = vpop.f32.mrf.mxu0
  %v811 = vadd.f32 0.0, %v810
  %v812 = vpop.f32.mrf.mxu0
  %813 = vmatprep.mubr.f32.mxu0 0.0
  %814 = vmatmul.mubr.f32.gmra.mxu0 %v700
  %v815 = vpop.f32.mrf.mxu0
  %v816 = vadd.f32 0.0, %v815
  %v817 = vpop.f32.mrf.mxu0
  %818 = vmatprep.mubr.f32.mxu0 0.0
  %819 = vmatmul.mubr.f32.gmra.mxu0 %v703
  %v820 = vpop.f32.mrf.mxu0
  %v821 = vadd.f32 0.0, %v820
  %v822 = vpop.f32.mrf.mxu0
  %823 = vmatprep.mubr.f32.mxu0 0.0
  %824 = vmatmul.mubr.f32.gmra.mxu0 %v706
  %v825 = vpop.f32.mrf.mxu0
  %v826 = vadd.f32 0.0, %v825
  %v827 = vpop.f32.mrf.mxu0
  %828 = vmatprep.mubr.f32.mxu0 0.0
  %829 = vmatmul.mubr.f32.gmra.mxu0 %v709
  %v830 = vpop.f32.mrf.mxu0
  %v831 = vadd.f32 0.0, %v830
  %v832 = vpop.f32.mrf.mxu0
  %833 = vmatprep.mubr.f32.mxu0 0.0
  %834 = vmatmul.mubr.f32.gmra.mxu0 %v712
  %v835 = vpop.f32.mrf.mxu0
  %v836 = vadd.f32 0.0, %v835
  %v837 = vpop.f32.mrf.mxu0
  %838 = vmatprep.mubr.f32.mxu0 0.0
  %839 = vmatmul.mubr.f32.gmra.mxu0 %v715
  %v840 = vpop.f32.mrf.mxu0
  %v841 = vadd.f32 0.0, %v840
  %v842 = vpop.f32.mrf.mxu0
  %843 = vmatprep.mubr.f32.mxu0 0.0
  %844 = vmatmul.mubr.f32.gmra.mxu0 %v718
  %v845 = vpop.f32.mrf.mxu0
  %v846 = vadd.f32 0.0, %v845
  %v847 = vpop.f32.mrf.mxu0
  %848 = vmatprep.mubr.f32.mxu0 0.0
  %849 = vmatmul.mubr.f32.gmra.mxu0 %v721
  %v850 = vpop.f32.mrf.mxu0
  %v851 = vadd.f32 0.0, %v850
  %v852 = vpop.f32.mrf.mxu0
  %853 = vmatprep.mubr.f32.mxu0 0.0
  %854 = vmatmul.mubr.f32.gmra.mxu0 %v724
  %v855 = vpop.f32.mrf.mxu0
  %v856 = vadd.f32 0.0, %v855
  %v857 = vpop.f32.mrf.mxu0
  %858 = vmatprep.mubr.f32.mxu0 0.0
  %859 = vmatmul.mubr.f32.gmra.mxu0 %v727
  %v860 = vpop.f32.mrf.mxu0
  %v861 = vadd.f32 0.0, %v860
  %v862 = vpop.f32.mrf.mxu0
  %863 = vmatprep.mubr.f32.mxu0 0.0
  %864 = vmatmul.mubr.f32.gmra.mxu0 %v730
  %v865 = vpop.f32.mrf.mxu0
  %v866 = vadd.f32 0.0, %v865
  %v867 = vpop.f32.mrf.mxu0
  %868 = vmatprep.mubr.f32.mxu0 0.0
  %869 = vmatmul.mubr.f32.gmra.mxu0 %v733
  %v870 = vpop.f32.mrf.mxu0
  %v871 = vadd.f32 0.0, %v870
  %v872 = vpop.f32.mrf.mxu0
  %873 = vmatprep.mubr.f32.mxu0 0.0
  %874 = vmatmul.mubr.f32.gmra.mxu0 %v736
  %v875 = vpop.f32.mrf.mxu0
  %v876 = vadd.f32 0.0, %v875
  %v877 = vpop.f32.mrf.mxu0
  %878 = vmatprep.mubr.f32.mxu0 0.0
  %879 = vmatmul.mubr.f32.gmra.mxu0 %v739
  %v880 = vpop.f32.mrf.mxu0
  %v881 = vadd.f32 0.0, %v880
  %v882 = vpop.f32.mrf.mxu0
  %883 = vmatprep.mubr.f32.mxu0 0.0
  %884 = vmatmul.mubr.f32.gmra.mxu0 %v742
  %v885 = vpop.f32.mrf.mxu0
  %v886 = vadd.f32 0.0, %v885
  %v887 = vpop.f32.mrf.mxu0
  %888 = vdwg.mxu0
  %v889 = vadd.f32 %v658, %v811
  %v890 = vadd.f32 %v659, %v816
  %v891 = vadd.f32 %v660, %v821
  %v892 = vadd.f32 %v661, %v826
  %v893 = vadd.f32 %v662, %v831
  %v894 = vadd.f32 %v663, %v836
  %v895 = vadd.f32 %v664, %v841
  %v896 = vadd.f32 %v665, %v846
  %v897 = vadd.f32 %v666, %v851
  %v898 = vadd.f32 %v667, %v856
  %v899 = vadd.f32 %v668, %v861
  %v900 = vadd.f32 %v669, %v866
  %v901 = vadd.f32 %v670, %v871
  %v902 = vadd.f32 %v671, %v876
  %v903 = vadd.f32 %v672, %v881
  %v904 = vadd.f32 %v673, %v886
  %v905 = vld [vmem:[%s2] sm:$0x1]
  %v907 = vlaneseq
  %v908 = vshrl.u32 %v907, 7
  %v909 = vsub.s32 0, %v908
  %v910 = vrot.slane %v905, %v909
  %v912 = vadd.f32 %v889, %v910
  %v913 = vadd.f32 %v890, %v910
  %v914 = vadd.f32 %v891, %v910
  %v915 = vadd.f32 %v892, %v910
  %v916 = vadd.f32 %v893, %v910
  %v917 = vadd.f32 %v894, %v910
  %v918 = vadd.f32 %v895, %v910
  %v919 = vadd.f32 %v896, %v910
  %v920 = vadd.f32 %v897, %v910
  %v921 = vadd.f32 %v898, %v910
  %v922 = vadd.f32 %v899, %v910
  %v923 = vadd.f32 %v900, %v910
  %v924 = vadd.f32 %v901, %v910
  %v925 = vadd.f32 %v902, %v910
  %v926 = vadd.f32 %v903, %v910
  %v927 = vadd.f32 %v904, %v910
  %928 = vxpose.xlu0.b32.start [1/16] %v912, 128
  %929 = vxpose.xlu0.b32.cont [2/16] %v913, 128
  %930 = vxpose.xlu0.b32.cont [3/16] %v914, 128
  %931 = vxpose.xlu0.b32.cont [4/16] %v915, 128
  %932 = vxpose.xlu0.b32.cont [5/16] %v916, 128
  %933 = vxpose.xlu0.b32.cont [6/16] %v917, 128
  %934 = vxpose.xlu0.b32.cont [7/16] %v918, 128
  %935 = vxpose.xlu0.b32.cont [8/16] %v919, 128
  %936 = vxpose.xlu0.b32.cont [9/16] %v920, 128
  %937 = vxpose.xlu0.b32.cont [10/16] %v921, 128
  %938 = vxpose.xlu0.b32.cont [11/16] %v922, 128
  %939 = vxpose.xlu0.b32.cont [12/16] %v923, 128
  %940 = vxpose.xlu0.b32.cont [13/16] %v924, 128
  %941 = vxpose.xlu0.b32.cont [14/16] %v925, 128
  %942 = vxpose.xlu0.b32.cont [15/16] %v926, 128
  %943 = vxpose.xlu0.b32.end [16/16] %v927, 128
  %v944 = vpop.trf.xlu0
  %v945 = vpop.trf.xlu0
  %v946 = vpop.trf.xlu0
  %v947 = vpop.trf.xlu0
  %v948 = vpop.trf.xlu0
  %v949 = vpop.trf.xlu0
  %v950 = vpop.trf.xlu0
  %v951 = vpop.trf.xlu0
  %v952 = vpop.trf.xlu0
  %v953 = vpop.trf.xlu0
  %v954 = vpop.trf.xlu0
  %v955 = vpop.trf.xlu0
  %v956 = vpop.trf.xlu0
  %v957 = vpop.trf.xlu0
  %v958 = vpop.trf.xlu0
  %v959 = vpop.trf.xlu0
  %vm960 = vcmask 1043456
  %v961 = vsel %vm960, %v944, -inf
  %v962 = vrot.slane %v961, 4
  %v963 = vmax.f32 %v961, %v962
  %v964 = vrot.slane %v963, 2
  %v965 = vmax.f32 %v963, %v964
  %v966 = vrot.slane %v965, 1
  %v967 = vmax.f32 %v965, %v966
  %v968 = vsub.f32 %v944, %v967
  %v969 = vmul.f32 %v968, 1.442695
  %v970 = vpow.pop %v969
  %v971 = vsel %vm960, %v970, 0.0
  %v972 = vrot.slane %v971, 4
  %v973 = vadd.f32 %v971, %v972
  %v974 = vrot.slane %v973, 2
  %v975 = vadd.f32 %v973, %v974
  %v976 = vrot.slane %v975, 1
  %v977 = vadd.f32 %v975, %v976
  %v978 = vrcp.pop %v977
  %v979 = vmul.f32 %v970, %v978
  %980 = vst [vmem:[%s3] sm:$0xf] %v979
  // Predicated region
  $region14: #{mechanism_competition.1} parent=0 // pred_check
    _
  $region15: #{mechanism_competition.1} parent=0 // pred_check_branch
    %982 = sbr.rel (0) target = $region17
  $region16: #{mechanism_competition.1} parent=0 // pred_region
    _
  $region17: #{mechanism_competition.1} parent=0 // pred_fallthru
    _
  // Predicated region
  $region18: #{mechanism_competition.1} parent=0 // pred_check
    _
  $region19: #{mechanism_competition.1} parent=0 // pred_check_branch
    %984 = sbr.rel (0) target = $region21
  $region20: #{mechanism_competition.1} parent=0 // pred_region
    _
  $region21: #{mechanism_competition.1} parent=0 // pred_fallthru
    _

</llo_original>
